<compile_context>
chip_gen: v7x
topology: tpu7x:2x2x1
jax: 0.10.0
libtpu: 0.0.40
codegen_flags: <defaults>
</compile_context>

<pallas_src>
import math
import functools

import jax
import jax.numpy as jnp
from jax import lax
from jax.experimental import pallas as pl
from jax.experimental.pallas import tpu as pltpu


# ----------------------------- parameter setup ------------------------------

def make_pe_table(d_model: int, max_len: int, dtype=jnp.float32) -> jnp.ndarray:
    """Positional-encoding buffer, shape [d_model, max_len] (channel-first)."""
    position = jnp.arange(0.0, max_len, dtype=jnp.float32)[:, None]            # [max_len, 1]
    div_term = jnp.exp(jnp.arange(0.0, d_model, 2, dtype=jnp.float32)
                       * -(math.log(10000.0) / d_model))                        # [d_model/2]
    pe = jnp.zeros((max_len, d_model), dtype=jnp.float32)
    pe = pe.at[:, 0::2].set(jnp.sin(position * div_term))
    pe = pe.at[:, 1::2].set(jnp.cos(position * div_term))
    # unsqueeze(0).transpose(1,2) -> [1, d_model, max_len]; leading 1 handled by broadcast.
    return pe.T.astype(dtype)                                                   # [d_model, max_len]


# ------------------------------ Pallas kernels -------------------------------

def _pe_add_kernel(x_ref, pe_ref, o_ref):
    # x_ref/o_ref: [TB, TD, TL]; pe_ref: [TD, TL] broadcasts over the batch tile.
    o_ref[...] = x_ref[...] + pe_ref[...]


def _hash_bits(idx_i32, seed_i32):
    """Counter-based PRNG: murmur3-style finalizer of (global element index, seed).

    Pure jnp integer ops -> works both under Mosaic lowering and interpret mode
    (pltpu.prng_seed has no CPU rule). Grid-invariant: the mask depends only on the
    element's global index and the seed, not on the tiling."""
    h = idx_i32.astype(jnp.uint32) + seed_i32.astype(jnp.uint32) * jnp.uint32(0x9E3779B9)
    h = h ^ (h >> 16)
    h = h * jnp.uint32(0x85EBCA6B)
    h = h ^ (h >> 13)
    h = h * jnp.uint32(0xC2B2AE35)
    h = h ^ (h >> 16)
    return h


def _pe_add_dropout_kernel(seed_ref, x_ref, pe_ref, o_ref, *,
                           keep_threshold_24, inv_keep_prob, dims):
    D_total, L_total = dims
    TB, TD, TL = x_ref.shape
    b0 = pl.program_id(2) * TB
    d0 = pl.program_id(0) * TD
    l0 = pl.program_id(1) * TL

    # Global flat element index (unique per element of the full array).
    bi = lax.broadcasted_iota(jnp.int32, (TB, TD, TL), 0)
    di = lax.broadcasted_iota(jnp.int32, (TB, TD, TL), 1)
    li = lax.broadcasted_iota(jnp.int32, (TB, TD, TL), 2)
    base = (b0 * D_total + d0) * L_total + l0
    idx = (bi * D_total + di) * L_total + li + base

    bits = _hash_bits(idx, seed_ref[0])
    # Signed int32 compare on the top 24 random bits: P(keep) = 1 - dropout_p.
    r24 = (bits >> 8).astype(jnp.int32)
    keep = r24 >= keep_threshold_24

    # Native-dtype compute (bf16 stays bf16 on v6e/v7x; f32 inputs stay f32 for v5e).
    y = x_ref[...] + pe_ref[...]
    scale = jnp.where(keep,
                      jnp.asarray(inv_keep_prob, dtype=y.dtype),
                      jnp.asarray(0, dtype=y.dtype))
    o_ref[...] = y * scale


# -------------------------------- tiling helpers ------------------------------

def _round_up(x: int, q: int) -> int:
    return ((x + q - 1) // q) * q


def _tile(dim: int, target: int, quantum: int) -> int:
    """Block extent: the full dim if it fits the target (always a legal block),
    otherwise a quantum-aligned target; ragged tails are handled by cdiv grids."""
    if dim <= target:
        return dim
    return (target // quantum) * quantum


# -------------------------------- wrapper ------------------------------------

def _pe_forward(x, pe, *, dropout_p, training, seed):
    B, D, L = x.shape
    itemsize = jnp.dtype(x.dtype).itemsize

    TD = _tile(D, 256, 8)
    TL = _tile(L, 1024, 128)
    # Batch-tile so each x block is ~2 MiB (HBM-granularity lever); total double-buffered
    # VMEM (x + out + pe) stays <= ~10 MiB -> safe on v5e's 16 MiB scoped default and v7x.
    TB = max(1, min(B, (2 * 1024 * 1024) // max(1, TD * TL * itemsize)))
    grid = (pl.cdiv(D, TD), pl.cdiv(L, TL), pl.cdiv(B, TB))   # batch innermost: pe stays resident

    out_shape = jax.ShapeDtypeStruct((B, D, L), x.dtype)
    cparams = pltpu.CompilerParams(
        dimension_semantics=("parallel", "parallel", "arbitrary"))

    if (not training) or dropout_p == 0.0:
        return pl.pallas_call(
            _pe_add_kernel,
            out_shape=out_shape,
            grid_spec=pltpu.PrefetchScalarGridSpec(
                num_scalar_prefetch=0,
                grid=grid,
                in_specs=[pl.BlockSpec((TB, TD, TL), lambda d, l, b: (b, d, l)),
                          pl.BlockSpec((TD, TL), lambda d, l, b: (d, l))],
                out_specs=pl.BlockSpec((TB, TD, TL), lambda d, l, b: (b, d, l)),
            ),
            compiler_params=cparams,
        )(x, pe)

    # Training mode: fused add + inverted dropout (caller must vary `seed` per step).
    keep_threshold_24 = int(round(float(dropout_p) * (1 << 24)))
    keep_threshold_24 = min(max(keep_threshold_24, 0), (1 << 24) - 1)
    inv_keep_prob = 1.0 / (1.0 - float(dropout_p))
    seed_arr = jnp.asarray([seed], dtype=jnp.int32)
    kern = functools.partial(_pe_add_dropout_kernel,
                             keep_threshold_24=keep_threshold_24,
                             inv_keep_prob=inv_keep_prob,
                             dims=(D, L))
    return pl.pallas_call(
        kern,
        out_shape=out_shape,
        grid_spec=pltpu.PrefetchScalarGridSpec(
            num_scalar_prefetch=1,
            grid=grid,
            in_specs=[pl.BlockSpec((TB, TD, TL), lambda d, l, b, seed: (b, d, l)),
                      pl.BlockSpec((TD, TL), lambda d, l, b, seed: (d, l))],
            out_specs=pl.BlockSpec((TB, TD, TL), lambda d, l, b, seed: (b, d, l)),
        ),
        compiler_params=cparams,
    )(seed_arr, x, pe)


def positional_encoding(x, pe, *, dropout_p=0.1, training=False, seed=0):
    """x: [B, C, L] (channel-first). pe: [d_model, max_len], C <= d_model, L == max_len."""
    B, D, L = x.shape
    assert pe.shape[1] == L, f"seq_len {L} must equal max_len {pe.shape[1]} (PyTorch broadcast rule)"
    assert pe.shape[0] >= D, f"channels {D} exceed d_model {pe.shape[0]}"
    assert 0.0 <= dropout_p < 1.0
    if pe.shape[0] > D:
        pe = pe[:D]                                    # matches torch's pe[:, :x.size(1)]
    pe = pe.astype(x.dtype)                            # don't stream pe wider than x

    if L % 128 == 0:
        return _pe_forward(x, pe, dropout_p=dropout_p, training=training, seed=seed)

    if (D * L) % 128 == 0:
        # Lane-dense slab: elementwise add is layout-invariant, and pe reshapes identically.
        rows = (D * L) // 128
        out = _pe_forward(x.reshape(B, rows, 128), pe.reshape(rows, 128),
                          dropout_p=dropout_p, training=training, seed=seed)
        return out.reshape(B, D, L)

    # Fallback: pad L to the next multiple of 128 (full-width stores) and slice back.
    Lp = _round_up(L, 128)
    xp = jnp.pad(x, ((0, 0), (0, 0), (0, Lp - L)))
    pep = jnp.pad(pe, ((0, 0), (0, Lp - L)))
    out = _pe_forward(xp, pep, dropout_p=dropout_p, training=training, seed=seed)
    return out[:, :, :L]


# ---------------------------------- main --------------------------------------

if __name__ == "__main__":
    # Shapes consistent with the module: x = [batch, d_model, seq_len], seq_len == max_len.
    B, D_MODEL, MAX_LEN = 2, 32, 128
    DROPOUT_P = 0.1

    key = jax.random.PRNGKey(0)
    x = jax.random.normal(key, (B, D_MODEL, MAX_LEN), dtype=jnp.float32)
    pe = make_pe_table(D_MODEL, MAX_LEN)
    ref = x + pe[None, :, :]

    # --- eval mode (dropout = identity): deterministic reference check ---
    out = jax.block_until_ready(positional_encoding(x, pe, dropout_p=DROPOUT_P, training=False))
    assert out.shape == x.shape and out.dtype == x.dtype
    assert jnp.allclose(out, ref, atol=1e-6), "eval-mode mismatch vs reference"

    # --- training mode: fused add + inverted dropout ---
    out_t = jax.block_until_ready(
        positional_encoding(x, pe, dropout_p=DROPOUT_P, training=True, seed=1234))
    assert out_t.shape == x.shape and out_t.dtype == x.dtype
    kept = out_t != 0.0
    scaled_ref = ref * (1.0 / (1.0 - DROPOUT_P))
    assert jnp.allclose(jnp.where(kept, out_t, 0.0),
                        jnp.where(kept, scaled_ref, 0.0),
                        atol=1e-5, rtol=1e-5), "dropout kept-values mismatch"
    drop_rate = 1.0 - float(jnp.mean(kept.astype(jnp.float32)))
    assert 0.02 < drop_rate < 0.30, f"dropout rate {drop_rate} implausible for p={DROPOUT_P}"

    # --- (D*L) % 128 == 0 slab path ---
    L2 = 16
    x2 = jax.random.normal(jax.random.PRNGKey(1), (B, D_MODEL, L2), dtype=jnp.float32)
    pe2 = make_pe_table(D_MODEL, L2)
    out2 = jax.block_until_ready(positional_encoding(x2, pe2, dropout_p=DROPOUT_P, training=False))
    assert jnp.allclose(out2, x2 + pe2[None, :, :], atol=1e-6), "slab-path mismatch vs reference"

    # --- pad path (L % 128 != 0 and D*L % 128 != 0) ---
    D3, L3 = 6, 20
    x3 = jax.random.normal(jax.random.PRNGKey(2), (B, D3, L3), dtype=jnp.float32)
    pe3 = make_pe_table(D3, L3)
    out3 = jax.block_until_ready(positional_encoding(x3, pe3, dropout_p=DROPOUT_P, training=False))
    assert jnp.allclose(out3, x3 + pe3[None, :, :], atol=1e-6), "pad-path mismatch vs reference"

    print("KERNEL_OK")
</pallas_src>

<mosaic_0001>
module attributes {stable_mosaic.version = 11 : i64} {
  func.func @_pe_add_kernel(%arg0: i32, %arg1: i32, %arg2: i32, %arg3: memref<2x32x128xf32, #tpu.memory_space<vmem>>, %arg4: memref<32x128xf32, #tpu.memory_space<vmem>>, %arg5: memref<2x32x128xf32, #tpu.memory_space<vmem>>) attributes {dimension_semantics = [#tpu.dimension_semantics<parallel>, #tpu.dimension_semantics<parallel>, #tpu.dimension_semantics<arbitrary>], iteration_bounds = array<i64: 1, 1, 1>, scalar_prefetch = 0 : i64, scratch_operands = 0 : i64, tpu.core_type = #tpu.core_type<tc>, window_params = [{transform_indices = @transform_0, window_bounds = array<i64: 2, 32, 128>}, {transform_indices = @transform_1, window_bounds = array<i64: 32, 128>}, {transform_indices = @transform_2, window_bounds = array<i64: 2, 32, 128>}]} {
    %c0 = arith.constant 0 : index
    %c0_0 = arith.constant 0 : index
    %c0_1 = arith.constant 0 : index
    %0 = vector.load %arg3[%c0, %c0_0, %c0_1] : memref<2x32x128xf32, #tpu.memory_space<vmem>>, vector<2x32x128xf32>
    %c0_2 = arith.constant 0 : index
    %c0_3 = arith.constant 0 : index
    %1 = vector.load %arg4[%c0_2, %c0_3] : memref<32x128xf32, #tpu.memory_space<vmem>>, vector<32x128xf32>
    %2 = vector.shape_cast %1 : vector<32x128xf32> to vector<1x32x128xf32>
    %3 = vector.broadcast %2 : vector<1x32x128xf32> to vector<2x32x128xf32>
    %4 = arith.addf %0, %3 : vector<2x32x128xf32>
    %c0_4 = arith.constant 0 : index
    %c0_5 = arith.constant 0 : index
    %c0_6 = arith.constant 0 : index
    %5 = vector.load %arg5[%c0_4, %c0_5, %c0_6] : memref<2x32x128xf32, #tpu.memory_space<vmem>>, vector<2x32x128xf32>
    tpu.vector_store %arg5[%c0_4, %c0_5, %c0_6], %4 {strides = array<i32>} : memref<2x32x128xf32, #tpu.memory_space<vmem>>, vector<2x32x128xf32>,
    return
  }
  func.func @transform_0(%arg0: i32, %arg1: i32, %arg2: i32) -> (i32, i32, i32) {
    %c0_i32 = arith.constant 0 : i32
    return %arg2, %arg0, %arg1 : i32, i32, i32
  }
  func.func @transform_1(%arg0: i32, %arg1: i32, %arg2: i32) -> (i32, i32) {
    %c0_i32 = arith.constant 0 : i32
    return %arg0, %arg1 : i32, i32
  }
  func.func @transform_2(%arg0: i32, %arg1: i32, %arg2: i32) -> (i32, i32, i32) {
    %c0_i32 = arith.constant 0 : i32
    return %arg2, %arg0, %arg1 : i32, i32, i32
  }
}

</mosaic_0001>

<llo_original>
// kernel: tpu_custom_call.1
$region0: #{tpu_custom_call.1}
  #allocation0 [shape = 'u32[]', space=smem, size = 0x4, offset = 0x4, fixed_abs, tag = 'smem constant byte address 0x4 - core index']
  #allocation1 [shape = 'u32[144,128]{1,0:T(1,128)}', space=vmem, size = 0x12000, scoped, tag = 'internal scratch']
  %s0 = inlined_call_operand.hbm [shape: f32[2,32,128], index: 0, kind: input, shape index: {}]
  %s1 = inlined_call_operand.hbm [shape: f32[32,128], index: 1, kind: input, shape index: {}]
  %s2 = inlined_call_operand.hbm [shape: f32[2,32,128], index: 2, kind: output, shape index: {}]
  %s3 = sld [smem:[#allocation0]]
  $region26: #{tpu_custom_call.1} parent=0
    _
  %s5 = ssub.s32 1, %s3
  %s6 = scalar_select 0, %s5, %s3
  $region1: #{tpu_custom_call.1} parent=0
    #allocation2 [shape = 'u8[32768]{0}', space=vmem, size = 0x8000, scoped, tag = 'input window, operand 0, single buffered']
    #allocation3 [shape = 's32[1]{0}', space=sflag, size = 0x4, scoped, tag = 'scoped memory for tpu_custom_call.1']
    #allocation4 [shape = 's32[1]{0}', space=sflag, size = 0x4, scoped, tag = 'scoped memory for tpu_custom_call.1']
    #allocation5 [shape = 'u8[16384]{0}', space=vmem, size = 0x4000, scoped, tag = 'input window, operand 1, single buffered']
    #allocation6 [shape = 's32[1]{0}', space=sflag, size = 0x4, scoped, tag = 'scoped memory for tpu_custom_call.1']
    #allocation7 [shape = 'u8[32768]{0}', space=vmem, size = 0x8000, scoped, tag = 'output window, operand 0, single buffered']
    %7 = vsyncpa [#allocation3], 0
    %8 = vsyncpa [#allocation6], 0
    %9 = vsyncpa [#allocation4], 0
    // Predicated region
    $region2: #{tpu_custom_call.1} parent=1 // pred_check
      _
    $region3: #{tpu_custom_call.1} parent=1 // pred_check_branch
      %11 = sbr.rel (0) target = $region5
    $region4: #{tpu_custom_call.1} parent=1 // pred_region
      %s13 = ssub.s32 1024, 1024
      %14 = vsyncadd [#allocation3], %s13
      %s15 = sshll.u32 [#allocation2], 4
      %s16 = int_to_ptr.vmem [resolvable:$true] %s15
      %21 = dma.hbm_to_vmem [thread:$0]  %s0, 1024, %s16, [#allocation3], 128, 128, 8
    $region5: #{tpu_custom_call.1} parent=1 // pred_fallthru
      _
    // Predicated region
    $region6: #{tpu_custom_call.1} parent=1 // pred_check
      _
    $region7: #{tpu_custom_call.1} parent=1 // pred_check_branch
      %23 = sbr.rel (0) target = $region9
    $region8: #{tpu_custom_call.1} parent=1 // pred_region
      %s25 = ssub.s32 512, 512
      %26 = vsyncadd [#allocation6], %s25
      %s27 = sshll.u32 [#allocation5], 4
      %s28 = int_to_ptr.vmem [resolvable:$true] %s27
      %33 = dma.hbm_to_vmem [thread:$0]  %s1, 512, %s28, [#allocation6], 128, 128, 8
    $region9: #{tpu_custom_call.1} parent=1 // pred_fallthru
      _
    // Predicated region
    $region10: #{tpu_custom_call.1} parent=1 // pred_check
      _
    $region11: #{tpu_custom_call.1} parent=1 // pred_check_branch
      %35 = sbr.rel (0) target = $region13
    $region12: #{tpu_custom_call.1} parent=1 // pred_region
      %36 = dma.done [#allocation3], 1024
    $region13: #{tpu_custom_call.1} parent=1 // pred_fallthru
      _
    // Predicated region
    $region14: #{tpu_custom_call.1} parent=1 // pred_check
      _
    $region15: #{tpu_custom_call.1} parent=1 // pred_check_branch
      %38 = sbr.rel (0) target = $region17
    $region16: #{tpu_custom_call.1} parent=1 // pred_region
      %39 = dma.done [#allocation6], 512
    $region17: #{tpu_custom_call.1} parent=1 // pred_fallthru
      _
    %v40 = vld [vmem:[#allocation2] sm:$0xff]
    %v41 = vld [vmem:[#allocation2 + $0x8] sm:$0xff]
    %v42 = vld [vmem:[#allocation2 + $0x10] sm:$0xff]
    %v43 = vld [vmem:[#allocation2 + $0x18] sm:$0xff]
    %v44 = vld [vmem:[#allocation2 + $0x20] sm:$0xff]
    %v45 = vld [vmem:[#allocation2 + $0x28] sm:$0xff]
    %v46 = vld [vmem:[#allocation2 + $0x30] sm:$0xff]
    %v47 = vld [vmem:[#allocation2 + $0x38] sm:$0xff]
    %v48 = vld [vmem:[#allocation5] sm:$0xff]
    %v49 = vld [vmem:[#allocation5 + $0x8] sm:$0xff]
    %v50 = vld [vmem:[#allocation5 + $0x10] sm:$0xff]
    %v51 = vld [vmem:[#allocation5 + $0x18] sm:$0xff]
    %v52 = vadd.f32 %v40, %v48
    %v53 = vadd.f32 %v41, %v49
    %v54 = vadd.f32 %v42, %v50
    %v55 = vadd.f32 %v43, %v51
    %v56 = vadd.f32 %v44, %v48
    %v57 = vadd.f32 %v45, %v49
    %v58 = vadd.f32 %v46, %v50
    %v59 = vadd.f32 %v47, %v51
    %60 = vst [vmem:[#allocation7] sm:$0xff] %v52
    %61 = vst [vmem:[#allocation7 + $0x8] sm:$0xff] %v53
    %62 = vst [vmem:[#allocation7 + $0x10] sm:$0xff] %v54
    %63 = vst [vmem:[#allocation7 + $0x18] sm:$0xff] %v55
    %64 = vst [vmem:[#allocation7 + $0x20] sm:$0xff] %v56
    %65 = vst [vmem:[#allocation7 + $0x28] sm:$0xff] %v57
    %66 = vst [vmem:[#allocation7 + $0x30] sm:$0xff] %v58
    %67 = vst [vmem:[#allocation7 + $0x38] sm:$0xff] %v59
    // Predicated region
    $region18: #{tpu_custom_call.1} parent=1 // pred_check
      _
    $region19: #{tpu_custom_call.1} parent=1 // pred_check_branch
      %69 = sbr.rel (0) target = $region21
    $region20: #{tpu_custom_call.1} parent=1 // pred_region
      %s71 = ssub.s32 1024, 1024
      %72 = vsyncadd [#allocation4], %s71
      %s73 = sshll.u32 [#allocation7], 4
      %s74 = int_to_ptr.vmem [resolvable:$true] %s73
      %79 = dma.vmem_to_hbm [thread:$0]  %s74, 1024, %s2, [#allocation4], 128, 128, 8
    $region21: #{tpu_custom_call.1} parent=1 // pred_fallthru
      _
    // Predicated region
    $region22: #{tpu_custom_call.1} parent=1 // pred_check
      _
    $region23: #{tpu_custom_call.1} parent=1 // pred_check_branch
      %81 = sbr.rel (0) target = $region25
    $region24: #{tpu_custom_call.1} parent=1 // pred_region
      %82 = dma.done [#allocation4], 1024
    $region25: #{tpu_custom_call.1} parent=1 // pred_fallthru
      _
    %83 = vsyncpa [#allocation3], 1
    %84 = vsyncpa [#allocation6], 1
    %85 = vsyncpa [#allocation4], 1

</llo_original>
